<compile_context>
chip_gen: v6e
topology: v6e:2x2x1
jax: 0.10.0
libtpu: 0.0.40
codegen_flags: <defaults>
</compile_context>

<pallas_src>
import functools

import jax
import jax.numpy as jnp
from jax.experimental import pallas as pl
from jax.experimental.pallas import tpu as pltpu

LANE = 128      # vreg lane width / MXU column granularity
SUBLANE = 8     # f32 sublane granularity
_MIB = 1024 * 1024


def _round_up(x, m):
    return ((x + m - 1) // m) * m


_VMEM_CAP = None


def _vmem_capacity_bytes():
    """Physical per-core VMEM (cached); conservative 64 MiB fallback (v7x)."""
    global _VMEM_CAP
    if _VMEM_CAP is None:
        try:
            _VMEM_CAP = int(pltpu.get_tpu_info().vmem_capacity_bytes)
        except Exception:  # pragma: no cover - query unsupported
            _VMEM_CAP = 64 * _MIB
    return _VMEM_CAP


# ---------------------------------------------------------------------------
# One-time parameter preparation (hoisted out of the per-call jit path).
# ---------------------------------------------------------------------------
def prepare_params(params, compute_dtype=jnp.bfloat16):
    """Pad feature dims to lane multiples and cast weights to the MXU dtype.

    Runs once; per-call HBM traffic is then just x + resident weights + output.
    Biases stay f32 (added after the f32 accumulation). The output feature dim
    is deliberately left unpadded (tiny outputs would otherwise pay ~16x writeback).
    """
    in_sz, hid = params["w1"].shape
    out_sz = params["wo"].shape[1]
    bpe = jnp.dtype(compute_dtype).itemsize
    # Large nets get 256-aligned dims so the streaming fallback can use 256x256
    # blocks without any per-call re-padding.
    rough_bytes = (in_sz * hid + hid * hid + hid * out_sz) * bpe
    g = 256 if rough_bytes > 32 * _MIB else LANE
    in_p, hid_p = _round_up(in_sz, g), _round_up(hid, g)

    def pad2(a, rows, cols, dt):
        return jnp.pad(a, ((0, rows - a.shape[0]), (0, cols - a.shape[1]))).astype(dt)

    return dict(
        w1=pad2(params["w1"], in_p, hid_p, compute_dtype),
        b1=pad2(params["b1"], 1, hid_p, jnp.float32),
        w2=pad2(params["w2"], hid_p, hid_p, compute_dtype),
        b2=pad2(params["b2"], 1, hid_p, jnp.float32),
        wo=pad2(params["wo"], hid_p, out_sz, compute_dtype),
        bo=pad2(params["bo"], 1, out_sz, jnp.float32),
    )


# ---------------------------------------------------------------------------
# Fused kernel (all three layers, weights resident in VMEM).
# ---------------------------------------------------------------------------
def _fused_mlp_kernel(x_ref, w1_ref, b1_ref, w2_ref, b2_ref, wo_ref, bo_ref, o_ref):
    # Cast x to the MXU dtype in-kernel (x is streamed from HBM as f32).
    x = x_ref[...].astype(w1_ref.dtype)
    # Layer 1 (to_hidden) + ReLU; dropout p=0 -> identity (nothing to emit).
    h = jnp.dot(x, w1_ref[...], preferred_element_type=jnp.float32)
    h = jnp.maximum(h + b1_ref[...], 0.0).astype(w2_ref.dtype)
    # Hidden layer (n_hidden_layers - 1 == 1 of these) + ReLU.
    h = jnp.dot(h, w2_ref[...], preferred_element_type=jnp.float32)
    h = jnp.maximum(h + b2_ref[...], 0.0).astype(wo_ref.dtype)
    # Output layer (no activation).
    o = jnp.dot(h, wo_ref[...], preferred_element_type=jnp.float32) + bo_ref[...]
    o_ref[...] = o.astype(o_ref.dtype)


# ---------------------------------------------------------------------------
# Streaming fallback: one K/N-tiled linear (+bias, optional ReLU) per layer.
# Used when the resident weights would not fit the VMEM budget (e.g. v7x 64 MiB).
# ---------------------------------------------------------------------------
def _linear_kernel(x_ref, w_ref, b_ref, o_ref, acc_ref, *, apply_relu):
    @pl.when(pl.program_id(2) == 0)
    def _():
        acc_ref[...] = jnp.zeros_like(acc_ref)

    acc_ref[...] += jnp.dot(x_ref[...].astype(w_ref.dtype), w_ref[...],
                            preferred_element_type=jnp.float32)

    @pl.when(pl.program_id(2) == pl.num_programs(2) - 1)
    def _():
        r = acc_ref[...] + b_ref[...]
        if apply_relu:
            r = jnp.maximum(r, 0.0)
        o_ref[...] = r.astype(o_ref.dtype)


def _pick_tile(dim, prefer=512):
    """Largest of 512/256/128 that divides dim, else the full dim (legal block)."""
    for t in (512, 256, 128):
        if t <= prefer and dim % t == 0:
            return t
    return dim


def _streamed_linear(x, w, b, *, apply_relu, out_dtype, bt, vmem_cap):
    M, K = x.shape
    N = w.shape[1]
    tm, tk, tn = bt, _pick_tile(K), _pick_tile(N)
    grid = (M // tm, N // tn, K // tk)

    x_bpe = x.dtype.itemsize
    w_bpe = w.dtype.itemsize
    o_bpe = jnp.dtype(out_dtype).itemsize
    budget = (2 * (tm * tk * x_bpe + tk * tn * w_bpe + tm * tn * o_bpe)
              + tm * tn * 4 + tn * 4 + 4 * _MIB)
    vmem_limit = int(min(vmem_cap, max(budget, 32 * _MIB)))
    cost = pl.CostEstimate(
        flops=2 * M * K * N,
        transcendentals=0,
        bytes_accessed=M * K * x_bpe + K * N * w_bpe + N * 4 + M * N * o_bpe,
    )

    return pl.pallas_call(
        functools.partial(_linear_kernel, apply_relu=apply_relu),
        out_shape=jax.ShapeDtypeStruct((M, N), out_dtype),
        grid_spec=pltpu.PrefetchScalarGridSpec(
            num_scalar_prefetch=0,
            grid=grid,
            in_specs=[
                pl.BlockSpec((tm, tk), lambda i, j, k: (i, k)),
                pl.BlockSpec((tk, tn), lambda i, j, k: (k, j)),
                pl.BlockSpec((1, tn), lambda i, j, k: (0, j)),
            ],
            out_specs=pl.BlockSpec((tm, tn), lambda i, j, k: (i, j)),
            scratch_shapes=[pltpu.VMEM((tm, tn), jnp.float32)],
        ),
        compiler_params=pltpu.CompilerParams(
            dimension_semantics=("parallel", "parallel", "arbitrary"),
            vmem_limit_bytes=vmem_limit,
        ),
        cost_estimate=cost,
    )(x, w, b)


# ---------------------------------------------------------------------------
# Forward wrapper.
# ---------------------------------------------------------------------------
@functools.partial(jax.jit,
                   static_argnames=("batch_tile", "out_dtype", "force_streaming"))
def mlp_forward(x, params, *, batch_tile=512, out_dtype=jnp.float32,
                force_streaming=False):
    """x: (B, input_size) f32. params: output of prepare_params()."""
    B, input_size = x.shape
    in_p, hid_p = params["w1"].shape
    out_cols = params["wo"].shape[1]
    w_bpe = params["w1"].dtype.itemsize
    o_bpe = jnp.dtype(out_dtype).itemsize

    vmem_cap = int(0.80 * _vmem_capacity_bytes())   # ~102 MiB v5e/v6e, ~51 MiB v7x
    margin = 4 * _MIB

    # ---- batch tile: multiple of 8 sublanes, never shrunk below 128 rows ----
    b_al = _round_up(B, SUBLANE)
    bt = min(_round_up(batch_tile, SUBLANE), b_al)
    # Split into >=2 grid steps (v7x megacore) only when each half keeps >=256 rows.
    if b_al // bt < 2 and b_al >= 512:
        half = _round_up((b_al + 1) // 2, SUBLANE)
        if half >= 256:
            bt = half

    weight_bytes = ((in_p * hid_p + hid_p * hid_p + hid_p * out_cols) * w_bpe
                    + (2 * hid_p + out_cols) * 4)

    def fused_budget(bt_):
        stream = 2 * (bt_ * in_p * 4 + bt_ * out_cols * o_bpe)  # double-buffered x/out
        live = 2 * bt_ * hid_p * 4                               # f32 intermediates
        return weight_bytes + stream + live + margin

    use_fused = (not force_streaming) and fused_budget(min(bt, 128)) <= vmem_cap
    if use_fused:
        while fused_budget(bt) > vmem_cap and bt > 128:
            bt = max(128, _round_up(bt // 2, SUBLANE))

    B_p = _round_up(B, bt)
    x_p = jnp.pad(x, ((0, B_p - B), (0, in_p - input_size)))   # stays f32; cast in-kernel

    if not use_fused:
        # Weights exceed the resident-VMEM budget: stream them per layer.
        # TODO(synk): a single-pallas_call variant (inner emit_pipeline over weight
        #             tiles) would also avoid the HBM round trip of the activations.
        h = _streamed_linear(x_p, params["w1"], params["b1"], apply_relu=True,
                             out_dtype=params["w1"].dtype, bt=bt, vmem_cap=vmem_cap)
        h = _streamed_linear(h, params["w2"], params["b2"], apply_relu=True,
                             out_dtype=params["w2"].dtype, bt=bt, vmem_cap=vmem_cap)
        y = _streamed_linear(h, params["wo"], params["bo"], apply_relu=False,
                             out_dtype=out_dtype, bt=bt, vmem_cap=vmem_cap)
        return y[:B]

    vmem_limit = int(min(vmem_cap, max(fused_budget(bt), 32 * _MIB)))
    cost = pl.CostEstimate(
        flops=2 * B_p * (in_p * hid_p + hid_p * hid_p + hid_p * out_cols),
        transcendentals=0,
        bytes_accessed=B_p * in_p * 4 + weight_bytes + B_p * out_cols * o_bpe,
    )

    def resident(shape):
        # Grid-invariant operands: single-buffered to halve their VMEM footprint.
        return pl.BlockSpec(shape, lambda i: (0, 0), pipeline_mode=pl.Buffered(1))

    y = pl.pallas_call(
        _fused_mlp_kernel,
        out_shape=jax.ShapeDtypeStruct((B_p, out_cols), out_dtype),
        grid_spec=pltpu.PrefetchScalarGridSpec(
            num_scalar_prefetch=0,
            grid=(B_p // bt,),
            in_specs=[
                pl.BlockSpec((bt, in_p), lambda i: (i, 0)),   # x tile (streamed, f32)
                resident((in_p, hid_p)),                      # W1
                resident((1, hid_p)),                         # b1
                resident((hid_p, hid_p)),                     # W2
                resident((1, hid_p)),                         # b2
                resident((hid_p, out_cols)),                  # Wout
                resident((1, out_cols)),                      # bout
            ],
            out_specs=pl.BlockSpec((bt, out_cols), lambda i: (i, 0)),
        ),
        compiler_params=pltpu.CompilerParams(
            dimension_semantics=("parallel",),
            vmem_limit_bytes=vmem_limit,
        ),
        cost_estimate=cost,
    )(x_p, params["w1"], params["b1"], params["w2"], params["b2"],
      params["wo"], params["bo"])
    return y[:B]


# ---------------------------------------------------------------------------
# Synthetic init + pure-JAX reference.
# ---------------------------------------------------------------------------
def init_params(key, input_size, hidden_size, output_size):
    """Deterministic synthetic init (Kaiming-ish, like linear_init for ReLU)."""
    # Module semantics: hidden_size is clamped up to min(input, output) if smaller.
    if hidden_size < min(output_size, input_size):
        hidden_size = min(output_size, input_size)
    ks = jax.random.split(key, 6)

    def dense(kw, kb, fan_in, fan_out):
        w = jax.random.normal(kw, (fan_in, fan_out), jnp.float32) * (2.0 / fan_in) ** 0.5
        b = jax.random.normal(kb, (1, fan_out), jnp.float32) * 0.01
        return w, b

    w1, b1 = dense(ks[0], ks[1], input_size, hidden_size)
    w2, b2 = dense(ks[2], ks[3], hidden_size, hidden_size)
    wo, bo = dense(ks[4], ks[5], hidden_size, output_size)
    return dict(w1=w1, b1=b1, w2=w2, b2=b2, wo=wo, bo=bo)


def mlp_reference(x, p, compute_dtype=jnp.float32):
    """Pure-JAX reference; compute_dtype=bfloat16 mimics the kernel's MXU precision."""
    dt = compute_dtype
    cast = lambda a: a.astype(dt)
    h = jnp.dot(cast(x), cast(p["w1"]), preferred_element_type=jnp.float32) + p["b1"]
    h = jnp.maximum(h, 0.0).astype(dt)
    h = jnp.dot(h, cast(p["w2"]), preferred_element_type=jnp.float32) + p["b2"]
    h = jnp.maximum(h, 0.0).astype(dt)
    return jnp.dot(h, cast(p["wo"]), preferred_element_type=jnp.float32) + p["bo"]


if __name__ == "__main__":
    # Shapes consistent with MLP(input_size=16, output_size=8, hidden_size=32,
    # n_hidden_layers=2) applied to a (16, 16) batch.
    B, input_size, hidden_size, output_size = 16, 16, 32, 8

    key = jax.random.PRNGKey(0)
    kx, kp = jax.random.split(key)
    x = jax.random.normal(kx, (B, input_size), jnp.float32)
    raw = init_params(kp, input_size, hidden_size, output_size)
    params = prepare_params(raw)           # one-time pad + bf16 cast (off the hot path)

    y = jax.block_until_ready(mlp_forward(x, params))
    assert y.shape == (B, output_size)

    # Check against a bf16-consistent reference (same precision as the kernel)...
    y_bf16 = mlp_reference(x, raw, compute_dtype=jnp.bfloat16)
    assert jnp.allclose(y, y_bf16, atol=2e-2, rtol=2e-2), float(jnp.max(jnp.abs(y - y_bf16)))
    # ...and sanity-check against full-f32 math with a bf16-appropriate tolerance.
    y_f32 = mlp_reference(x, raw, compute_dtype=jnp.float32)
    assert jnp.allclose(y, y_f32, atol=1e-1, rtol=1e-1), float(jnp.max(jnp.abs(y - y_f32)))

    # Exercise the large-weight streaming fallback path on the same small problem.
    y_stream = jax.block_until_ready(mlp_forward(x, params, force_streaming=True))
    assert y_stream.shape == (B, output_size)
    assert jnp.allclose(y_stream, y_bf16, atol=2e-2, rtol=2e-2), \
        float(jnp.max(jnp.abs(y_stream - y_bf16)))

    print("KERNEL_OK")
</pallas_src>

<mosaic_0001>
module attributes {stable_mosaic.version = 11 : i64} {
  func.func @_fused_mlp_kernel(%arg0: i32, %arg1: memref<16x128xf32, #tpu.memory_space<vmem>>, %arg2: memref<128x128xbf16, #tpu.memory_space<vmem>>, %arg3: memref<1x128xf32, #tpu.memory_space<vmem>>, %arg4: memref<128x128xbf16, #tpu.memory_space<vmem>>, %arg5: memref<1x128xf32, #tpu.memory_space<vmem>>, %arg6: memref<128x8xbf16, #tpu.memory_space<vmem>>, %arg7: memref<1x8xf32, #tpu.memory_space<vmem>>, %arg8: memref<16x8xf32, #tpu.memory_space<vmem>>) attributes {dimension_semantics = [#tpu.dimension_semantics<parallel>], iteration_bounds = array<i64: 1>, scalar_prefetch = 0 : i64, scratch_operands = 0 : i64, tpu.core_type = #tpu.core_type<tc>, window_params = [{transform_indices = @transform_0, window_bounds = array<i64: 16, 128>}, {pipeline_mode = #tpu.pipeline_mode<synchronous>, transform_indices = @transform_1, window_bounds = array<i64: 128, 128>}, {pipeline_mode = #tpu.pipeline_mode<synchronous>, transform_indices = @transform_2, window_bounds = array<i64: 1, 128>}, {pipeline_mode = #tpu.pipeline_mode<synchronous>, transform_indices = @transform_3, window_bounds = array<i64: 128, 128>}, {pipeline_mode = #tpu.pipeline_mode<synchronous>, transform_indices = @transform_4, window_bounds = array<i64: 1, 128>}, {pipeline_mode = #tpu.pipeline_mode<synchronous>, transform_indices = @transform_5, window_bounds = array<i64: 128, 8>}, {pipeline_mode = #tpu.pipeline_mode<synchronous>, transform_indices = @transform_6, window_bounds = array<i64: 1, 8>}, {transform_indices = @transform_7, window_bounds = array<i64: 16, 8>}]} {
    %c0 = arith.constant 0 : index
    %c0_0 = arith.constant 0 : index
    %0 = vector.load %arg1[%c0, %c0_0] : memref<16x128xf32, #tpu.memory_space<vmem>>, vector<16x128xf32>
    %1 = arith.truncf %0 : vector<16x128xf32> to vector<16x128xbf16>
    %c0_1 = arith.constant 0 : index
    %c0_2 = arith.constant 0 : index
    %2 = vector.load %arg2[%c0_1, %c0_2] : memref<128x128xbf16, #tpu.memory_space<vmem>>, vector<128x128xbf16>
    %cst = arith.constant dense<0.000000e+00> : vector<16x128xf32>
    %3 = tpu.matmul %1, %2, %cst {dimension_numbers = #tpu.dot_dimension_numbers<[1], [0], [0], [1], [0, 0, 1, 1], [], []>} : vector<16x128xbf16>, vector<128x128xbf16>, vector<16x128xf32> -> vector<16x128xf32>
    %c0_3 = arith.constant 0 : index
    %c0_4 = arith.constant 0 : index
    %4 = vector.load %arg3[%c0_3, %c0_4] : memref<1x128xf32, #tpu.memory_space<vmem>>, vector<1x128xf32>
    %5 = vector.broadcast %4 : vector<1x128xf32> to vector<16x128xf32>
    %6 = arith.addf %3, %5 : vector<16x128xf32>
    %cst_5 = arith.constant 0.000000e+00 : f32
    %7 = vector.broadcast %cst_5 : f32 to vector<16x128xf32>
    %8 = arith.maximumf %6, %7 : vector<16x128xf32>
    %9 = arith.truncf %8 : vector<16x128xf32> to vector<16x128xbf16>
    %c0_6 = arith.constant 0 : index
    %c0_7 = arith.constant 0 : index
    %10 = vector.load %arg4[%c0_6, %c0_7] : memref<128x128xbf16, #tpu.memory_space<vmem>>, vector<128x128xbf16>
    %cst_8 = arith.constant dense<0.000000e+00> : vector<16x128xf32>
    %11 = tpu.matmul %9, %10, %cst_8 {dimension_numbers = #tpu.dot_dimension_numbers<[1], [0], [0], [1], [0, 0, 1, 1], [], []>} : vector<16x128xbf16>, vector<128x128xbf16>, vector<16x128xf32> -> vector<16x128xf32>
    %c0_9 = arith.constant 0 : index
    %c0_10 = arith.constant 0 : index
    %12 = vector.load %arg5[%c0_9, %c0_10] : memref<1x128xf32, #tpu.memory_space<vmem>>, vector<1x128xf32>
    %13 = vector.broadcast %12 : vector<1x128xf32> to vector<16x128xf32>
    %14 = arith.addf %11, %13 : vector<16x128xf32>
    %cst_11 = arith.constant 0.000000e+00 : f32
    %15 = vector.broadcast %cst_11 : f32 to vector<16x128xf32>
    %16 = arith.maximumf %14, %15 : vector<16x128xf32>
    %17 = arith.truncf %16 : vector<16x128xf32> to vector<16x128xbf16>
    %c0_12 = arith.constant 0 : index
    %c0_13 = arith.constant 0 : index
    %18 = vector.load %arg6[%c0_12, %c0_13] : memref<128x8xbf16, #tpu.memory_space<vmem>>, vector<128x8xbf16>
    %cst_14 = arith.constant dense<0.000000e+00> : vector<16x8xf32>
    %19 = tpu.matmul %17, %18, %cst_14 {dimension_numbers = #tpu.dot_dimension_numbers<[1], [0], [0], [1], [0, 0, 1, 1], [], []>} : vector<16x128xbf16>, vector<128x8xbf16>, vector<16x8xf32> -> vector<16x8xf32>
    %c0_15 = arith.constant 0 : index
    %c0_16 = arith.constant 0 : index
    %20 = vector.load %arg7[%c0_15, %c0_16] : memref<1x8xf32, #tpu.memory_space<vmem>>, vector<1x8xf32>
    %21 = vector.broadcast %20 : vector<1x8xf32> to vector<16x8xf32>
    %22 = arith.addf %19, %21 : vector<16x8xf32>
    %c0_17 = arith.constant 0 : index
    %c0_18 = arith.constant 0 : index
    %23 = vector.load %arg8[%c0_17, %c0_18] : memref<16x8xf32, #tpu.memory_space<vmem>>, vector<16x8xf32>
    tpu.vector_store %arg8[%c0_17, %c0_18], %22 {strides = array<i32>} : memref<16x8xf32, #tpu.memory_space<vmem>>, vector<16x8xf32>,
    return
  }
  func.func @transform_0(%arg0: i32) -> (i32, i32) {
    %c0_i32 = arith.constant 0 : i32
    %c0_i32_0 = arith.constant 0 : i32
    return %arg0, %c0_i32 : i32, i32
  }
  func.func @transform_1(%arg0: i32) -> (i32, i32) {
    %c0_i32 = arith.constant 0 : i32
    %c0_i32_0 = arith.constant 0 : i32
    %c0_i32_1 = arith.constant 0 : i32
    return %c0_i32, %c0_i32_0 : i32, i32
  }
  func.func @transform_2(%arg0: i32) -> (i32, i32) {
    %c0_i32 = arith.constant 0 : i32
    %c0_i32_0 = arith.constant 0 : i32
    %c0_i32_1 = arith.constant 0 : i32
    return %c0_i32, %c0_i32_0 : i32, i32
  }
  func.func @transform_3(%arg0: i32) -> (i32, i32) {
    %c0_i32 = arith.constant 0 : i32
    %c0_i32_0 = arith.constant 0 : i32
    %c0_i32_1 = arith.constant 0 : i32
    return %c0_i32, %c0_i32_0 : i32, i32
  }
  func.func @transform_4(%arg0: i32) -> (i32, i32) {
    %c0_i32 = arith.constant 0 : i32
    %c0_i32_0 = arith.constant 0 : i32
    %c0_i32_1 = arith.constant 0 : i32
    return %c0_i32, %c0_i32_0 : i32, i32
  }
  func.func @transform_5(%arg0: i32) -> (i32, i32) {
    %c0_i32 = arith.constant 0 : i32
    %c0_i32_0 = arith.constant 0 : i32
    %c0_i32_1 = arith.constant 0 : i32
    return %c0_i32, %c0_i32_0 : i32, i32
  }
  func.func @transform_6(%arg0: i32) -> (i32, i32) {
    %c0_i32 = arith.constant 0 : i32
    %c0_i32_0 = arith.constant 0 : i32
    %c0_i32_1 = arith.constant 0 : i32
    return %c0_i32, %c0_i32_0 : i32, i32
  }
  func.func @transform_7(%arg0: i32) -> (i32, i32) {
    %c0_i32 = arith.constant 0 : i32
    %c0_i32_0 = arith.constant 0 : i32
    return %arg0, %c0_i32 : i32, i32
  }
}

</mosaic_0001>

<llo_original>
// kernel: mlp_forward.1
$region0: #{mlp_forward.1}
  #allocation0 [shape = 'u32[]', space=smem, size = 0x4, offset = 0x4, fixed_abs, tag = 'smem constant byte address 0x4 - core index']
  #allocation1 [shape = 'u32[144,128]{1,0:T(1,128)}', space=vmem, size = 0x12000, scoped, tag = 'internal scratch']
  %s0 = inlined_call_operand.vmem [shape: f32[16,128], index: 0, kind: input, shape index: {}]
  %s1 = inlined_call_operand.vmem [shape: bf16[128,128], index: 1, kind: input, shape index: {}]
  %s2 = inlined_call_operand.vmem [shape: f32[1,128], index: 2, kind: input, shape index: {}]
  %s3 = inlined_call_operand.hbm [shape: bf16[128,128], index: 3, kind: input, shape index: {}]
  %s4 = inlined_call_operand.vmem [shape: f32[1,128], index: 4, kind: input, shape index: {}]
  %s5 = inlined_call_operand.vmem [shape: bf16[128,8], index: 5, kind: input, shape index: {}]
  %s6 = inlined_call_operand.vmem [shape: f32[1,8], index: 6, kind: input, shape index: {}]
  %s7 = inlined_call_operand.vmem [shape: f32[16,8], index: 7, kind: output, shape index: {}]
  %s8 = sld [smem:[#allocation0]]
  $region42: #{mlp_forward.1} parent=0
    _
  %s10 = ssub.s32 1, %s8
  %s11 = scalar_select 0, %s10, %s8
  $region1: #{mlp_forward.1} parent=0
    #allocation2 [shape = 'u8[32768]{0}', space=vmem, size = 0x8000, scoped, tag = 'input window, operand 3, single buffered']
    #allocation3 [shape = 's32[1]{0}', space=sflag, size = 0x4, scoped, tag = 'scoped memory for mlp_forward.1']
    %12 = vsyncpa [#allocation3], 0
    // Predicated region
    $region2: #{mlp_forward.1} parent=1 // pred_check
      _
    $region3: #{mlp_forward.1} parent=1 // pred_check_branch
      %14 = sbr.rel (0) target = $region5
    $region4: #{mlp_forward.1} parent=1 // pred_region
      _
    $region5: #{mlp_forward.1} parent=1 // pred_fallthru
      _
    // Predicated region
    $region6: #{mlp_forward.1} parent=1 // pred_check
      _
    $region7: #{mlp_forward.1} parent=1 // pred_check_branch
      %16 = sbr.rel (0) target = $region9
    $region8: #{mlp_forward.1} parent=1 // pred_region
      _
    $region9: #{mlp_forward.1} parent=1 // pred_fallthru
      _
    // Predicated region
    $region10: #{mlp_forward.1} parent=1 // pred_check
      _
    $region11: #{mlp_forward.1} parent=1 // pred_check_branch
      %18 = sbr.rel (0) target = $region13
    $region12: #{mlp_forward.1} parent=1 // pred_region
      _
    $region13: #{mlp_forward.1} parent=1 // pred_fallthru
      _
    // Predicated region
    $region14: #{mlp_forward.1} parent=1 // pred_check
      _
    $region15: #{mlp_forward.1} parent=1 // pred_check_branch
      %20 = sbr.rel (0) target = $region17
    $region16: #{mlp_forward.1} parent=1 // pred_region
      %s22 = ssub.s32 1024, 1024
      %23 = vsyncadd [#allocation3], %s22
      %s24 = sshll.u32 [#allocation2], 4
      %s25 = int_to_ptr.vmem [resolvable:$true] %s24
      %30 = dma.hbm_to_vmem [thread:$0]  %s3, 1024, %s25, [#allocation3], 64, 64, 4
    $region17: #{mlp_forward.1} parent=1 // pred_fallthru
      _
    // Predicated region
    $region18: #{mlp_forward.1} parent=1 // pred_check
      _
    $region19: #{mlp_forward.1} parent=1 // pred_check_branch
      %32 = sbr.rel (0) target = $region21
    $region20: #{mlp_forward.1} parent=1 // pred_region
      _
    $region21: #{mlp_forward.1} parent=1 // pred_fallthru
      _
    // Predicated region
    $region22: #{mlp_forward.1} parent=1 // pred_check
      _
    $region23: #{mlp_forward.1} parent=1 // pred_check_branch
      %34 = sbr.rel (0) target = $region25
    $region24: #{mlp_forward.1} parent=1 // pred_region
      _
    $region25: #{mlp_forward.1} parent=1 // pred_fallthru
      _
    // Predicated region
    $region26: #{mlp_forward.1} parent=1 // pred_check
      _
    $region27: #{mlp_forward.1} parent=1 // pred_check_branch
      %36 = sbr.rel (0) target = $region29
    $region28: #{mlp_forward.1} parent=1 // pred_region
      _
    $region29: #{mlp_forward.1} parent=1 // pred_fallthru
      _
    // Predicated region
    $region30: #{mlp_forward.1} parent=1 // pred_check
      _
    $region31: #{mlp_forward.1} parent=1 // pred_check_branch
      %38 = sbr.rel (0) target = $region33
    $region32: #{mlp_forward.1} parent=1 // pred_region
      %39 = dma.done [#allocation3], 1024
    $region33: #{mlp_forward.1} parent=1 // pred_fallthru
      _
    %v41 = vld [vmem:[%s0] sm:$0xff]
    %v42 = vld [vmem:[%s0 + $0x8] sm:$0xff]
    %v43 = vpack.c.bf16 %v42, %v41
    %v44 = vld [vmem:[%s1] sm:$0xf]
    %v45 = vld [vmem:[%s1 + $0x4] sm:$0xf]
    %v46 = vld [vmem:[%s1 + $0x8] sm:$0xf]
    %v47 = vld [vmem:[%s1 + $0xc] sm:$0xf]
    %v48 = vld [vmem:[%s1 + $0x10] sm:$0xf]
    %v49 = vld [vmem:[%s1 + $0x14] sm:$0xf]
    %v50 = vld [vmem:[%s1 + $0x18] sm:$0xf]
    %v51 = vld [vmem:[%s1 + $0x1c] sm:$0xf]
    %v52 = vld [vmem:[%s1 + $0x20] sm:$0xf]
    %v53 = vld [vmem:[%s1 + $0x24] sm:$0xf]
    %v54 = vld [vmem:[%s1 + $0x28] sm:$0xf]
    %v55 = vld [vmem:[%s1 + $0x2c] sm:$0xf]
    %v56 = vld [vmem:[%s1 + $0x30] sm:$0xf]
    %v57 = vld [vmem:[%s1 + $0x34] sm:$0xf]
    %v58 = vld [vmem:[%s1 + $0x38] sm:$0xf]
    %v59 = vld [vmem:[%s1 + $0x3c] sm:$0xf]
    %v60 = vld [vmem:[%s2] sm:$0x1]
    %v62 = vlaneseq
    %v63 = vshrl.u32 %v62, 7
    %v64 = vsub.s32 0, %v63
    %v65 = vrot.slane %v60, %v64
    %v83 = vunpack.c.l.b16 %v44
    %v84 = vunpack.c.l.b16 %v45
    %v85 = vunpack.c.l.b16 %v46
    %v86 = vunpack.c.l.b16 %v47
    %v87 = vunpack.c.l.b16 %v48
    %v88 = vunpack.c.l.b16 %v49
    %v89 = vunpack.c.l.b16 %v50
    %v90 = vunpack.c.l.b16 %v51
    %v91 = vunpack.c.l.b16 %v52
    %v92 = vunpack.c.l.b16 %v53
    %v93 = vunpack.c.l.b16 %v54
    %v94 = vunpack.c.l.b16 %v55
    %v95 = vunpack.c.l.b16 %v56
    %v96 = vunpack.c.l.b16 %v57
    %v97 = vunpack.c.l.b16 %v58
    %v98 = vunpack.c.l.b16 %v59
    %v99 = vpack.c.b16 %v84, %v83
    %v100 = vpack.c.b16 %v86, %v85
    %v101 = vpack.c.b16 %v88, %v87
    %v102 = vpack.c.b16 %v90, %v89
    %v103 = vpack.c.b16 %v92, %v91
    %v104 = vpack.c.b16 %v94, %v93
    %v105 = vpack.c.b16 %v96, %v95
    %v106 = vpack.c.b16 %v98, %v97
    %115 = vmatprep.subr.bf16.mxu0 0
    %116 = vmatpush1.bf16.msra.mxu0 %v106
    %117 = vmatprep.subr.bf16.mxu0 0
    %118 = vmatpush1.bf16.msra.mxu0 %v105
    %119 = vmatprep.subr.bf16.mxu0 0
    %120 = vmatpush1.bf16.msra.mxu0 %v104
    %121 = vmatprep.subr.bf16.mxu0 0
    %122 = vmatpush1.bf16.msra.mxu0 %v103
    %123 = vmatprep.subr.bf16.mxu0 0
    %124 = vmatpush1.bf16.msra.mxu0 %v102
    %125 = vmatprep.subr.bf16.mxu0 0
    %126 = vmatpush1.bf16.msra.mxu0 %v101
    %127 = vmatprep.subr.bf16.mxu0 0
    %128 = vmatpush1.bf16.msra.mxu0 %v100
    %129 = vmatprep.subr.bf16.mxu0 0
    %130 = vmatpush1.bf16.msra.mxu0 %v99
    %131 = vmatprep.subr.bf16.mxu0 0
    %132 = vmatpush2.bf16.msra.mxu0 0
    %133 = vmatprep.subr.bf16.mxu0 0
    %134 = vmatpush2.bf16.msra.mxu0 0
    %135 = vmatprep.subr.bf16.mxu0 0
    %136 = vmatpush2.bf16.msra.mxu0 0
    %137 = vmatprep.subr.bf16.mxu0 0
    %138 = vmatpush2.bf16.msra.mxu0 0
    %139 = vmatprep.subr.bf16.mxu0 0
    %140 = vmatpush2.bf16.msra.mxu0 0
    %141 = vmatprep.subr.bf16.mxu0 0
    %142 = vmatpush2.bf16.msra.mxu0 0
    %143 = vmatprep.subr.bf16.mxu0 0
    %144 = vmatpush2.bf16.msra.mxu0 0
    %145 = vmatprep.subr.bf16.mxu0 0
    %146 = vmatpush2.bf16.msra.mxu0 0
    %147 = vmatprep.mubr.bf16.mxu0 0
    %148 = vmatmul.mubr.bf16.gmra.mxu0 %v43
    %v149 = vpop.f32.mrf.mxu0
    %v150 = vadd.f32 %v65, %v149
    %v151 = vpop.f32.mrf.mxu0
    %v152 = vpop.f32.mrf.mxu0
    %v153 = vadd.f32 %v65, %v152
    %v154 = vpop.f32.mrf.mxu0
    %155 = vdwg.mxu0
    %v156 = vmax.f32 %v150, 0.0
    %v157 = vmax.f32 %v153, 0.0
    %v158 = vpack.c.bf16 %v157, %v156
    %v159 = vld [vmem:[#allocation2] sm:$0xf]
    %v160 = vld [vmem:[#allocation2 + $0x4] sm:$0xf]
    %v161 = vld [vmem:[#allocation2 + $0x8] sm:$0xf]
    %v162 = vld [vmem:[#allocation2 + $0xc] sm:$0xf]
    %v163 = vld [vmem:[#allocation2 + $0x10] sm:$0xf]
    %v164 = vld [vmem:[#allocation2 + $0x14] sm:$0xf]
    %v165 = vld [vmem:[#allocation2 + $0x18] sm:$0xf]
    %v166 = vld [vmem:[#allocation2 + $0x1c] sm:$0xf]
    %v167 = vld [vmem:[#allocation2 + $0x20] sm:$0xf]
    %v168 = vld [vmem:[#allocation2 + $0x24] sm:$0xf]
    %v169 = vld [vmem:[#allocation2 + $0x28] sm:$0xf]
    %v170 = vld [vmem:[#allocation2 + $0x2c] sm:$0xf]
    %v171 = vld [vmem:[#allocation2 + $0x30] sm:$0xf]
    %v172 = vld [vmem:[#allocation2 + $0x34] sm:$0xf]
    %v173 = vld [vmem:[#allocation2 + $0x38] sm:$0xf]
    %v174 = vld [vmem:[#allocation2 + $0x3c] sm:$0xf]
    %v175 = vld [vmem:[%s4] sm:$0x1]
    %v177 = vlaneseq
    %v178 = vshrl.u32 %v177, 7
    %v179 = vsub.s32 0, %v178
    %v180 = vrot.slane %v175, %v179
    %v198 = vunpack.c.l.b16 %v159
    %v199 = vunpack.c.l.b16 %v160
    %v200 = vunpack.c.l.b16 %v161
    %v201 = vunpack.c.l.b16 %v162
    %v202 = vunpack.c.l.b16 %v163
    %v203 = vunpack.c.l.b16 %v164
    %v204 = vunpack.c.l.b16 %v165
    %v205 = vunpack.c.l.b16 %v166
    %v206 = vunpack.c.l.b16 %v167
    %v207 = vunpack.c.l.b16 %v168
    %v208 = vunpack.c.l.b16 %v169
    %v209 = vunpack.c.l.b16 %v170
    %v210 = vunpack.c.l.b16 %v171
    %v211 = vunpack.c.l.b16 %v172
    %v212 = vunpack.c.l.b16 %v173
    %v213 = vunpack.c.l.b16 %v174
    %v214 = vpack.c.b16 %v199, %v198
    %v215 = vpack.c.b16 %v201, %v200
    %v216 = vpack.c.b16 %v203, %v202
    %v217 = vpack.c.b16 %v205, %v204
    %v218 = vpack.c.b16 %v207, %v206
    %v219 = vpack.c.b16 %v209, %v208
    %v220 = vpack.c.b16 %v211, %v210
    %v221 = vpack.c.b16 %v213, %v212
    %230 = vmatprep.subr.bf16.mxu0 0
    %231 = vmatpush1.bf16.msra.mxu0 %v221
    %232 = vmatprep.subr.bf16.mxu0 0
    %233 = vmatpush1.bf16.msra.mxu0 %v220
    %234 = vmatprep.subr.bf16.mxu0 0
    %235 = vmatpush1.bf16.msra.mxu0 %v219
    %236 = vmatprep.subr.bf16.mxu0 0
    %237 = vmatpush1.bf16.msra.mxu0 %v218
    %238 = vmatprep.subr.bf16.mxu0 0
    %239 = vmatpush1.bf16.msra.mxu0 %v217
    %240 = vmatprep.subr.bf16.mxu0 0
    %241 = vmatpush1.bf16.msra.mxu0 %v216
    %242 = vmatprep.subr.bf16.mxu0 0
    %243 = vmatpush1.bf16.msra.mxu0 %v215
    %244 = vmatprep.subr.bf16.mxu0 0
    %245 = vmatpush1.bf16.msra.mxu0 %v214
    %246 = vmatprep.subr.bf16.mxu0 0
    %247 = vmatpush2.bf16.msra.mxu0 0
    %248 = vmatprep.subr.bf16.mxu0 0
    %249 = vmatpush2.bf16.msra.mxu0 0
    %250 = vmatprep.subr.bf16.mxu0 0
    %251 = vmatpush2.bf16.msra.mxu0 0
    %252 = vmatprep.subr.bf16.mxu0 0
    %253 = vmatpush2.bf16.msra.mxu0 0
    %254 = vmatprep.subr.bf16.mxu0 0
    %255 = vmatpush2.bf16.msra.mxu0 0
    %256 = vmatprep.subr.bf16.mxu0 0
    %257 = vmatpush2.bf16.msra.mxu0 0
    %258 = vmatprep.subr.bf16.mxu0 0
    %259 = vmatpush2.bf16.msra.mxu0 0
    %260 = vmatprep.subr.bf16.mxu0 0
    %261 = vmatpush2.bf16.msra.mxu0 0
    %262 = vmatprep.mubr.bf16.mxu0 0
    %263 = vmatmul.mubr.bf16.gmra.mxu0 %v158
    %v264 = vpop.f32.mrf.mxu0
    %v265 = vadd.f32 %v180, %v264
    %v266 = vpop.f32.mrf.mxu0
    %v267 = vpop.f32.mrf.mxu0
    %v268 = vadd.f32 %v180, %v267
    %v269 = vpop.f32.mrf.mxu0
    %270 = vdwg.mxu0
    %v271 = vmax.f32 %v265, 0.0
    %v272 = vmax.f32 %v268, 0.0
    %v273 = vpack.c.bf16 %v272, %v271
    %v274 = vld [vmem:[%s5] sm:$0xf]
    %v275 = vld [vmem:[%s5 + $0x4] sm:$0xf]
    %v276 = vld [vmem:[%s5 + $0x8] sm:$0xf]
    %v277 = vld [vmem:[%s5 + $0xc] sm:$0xf]
    %v278 = vld [vmem:[%s5 + $0x10] sm:$0xf]
    %v279 = vld [vmem:[%s5 + $0x14] sm:$0xf]
    %v280 = vld [vmem:[%s5 + $0x18] sm:$0xf]
    %v281 = vld [vmem:[%s5 + $0x1c] sm:$0xf]
    %v282 = vld [vmem:[%s5 + $0x20] sm:$0xf]
    %v283 = vld [vmem:[%s5 + $0x24] sm:$0xf]
    %v284 = vld [vmem:[%s5 + $0x28] sm:$0xf]
    %v285 = vld [vmem:[%s5 + $0x2c] sm:$0xf]
    %v286 = vld [vmem:[%s5 + $0x30] sm:$0xf]
    %v287 = vld [vmem:[%s5 + $0x34] sm:$0xf]
    %v288 = vld [vmem:[%s5 + $0x38] sm:$0xf]
    %v289 = vld [vmem:[%s5 + $0x3c] sm:$0xf]
    %v290 = vld [vmem:[%s6] sm:$0x1]
    %v292 = vlaneseq
    %v293 = vshrl.u32 %v292, 7
    %v294 = vsub.s32 0, %v293
    %v295 = vrot.slane %v290, %v294
    %v313 = vunpack.c.l.b16 %v274
    %v314 = vunpack.c.l.b16 %v275
    %v315 = vunpack.c.l.b16 %v276
    %v316 = vunpack.c.l.b16 %v277
    %v317 = vunpack.c.l.b16 %v278
    %v318 = vunpack.c.l.b16 %v279
    %v319 = vunpack.c.l.b16 %v280
    %v320 = vunpack.c.l.b16 %v281
    %v321 = vunpack.c.l.b16 %v282
    %v322 = vunpack.c.l.b16 %v283
    %v323 = vunpack.c.l.b16 %v284
    %v324 = vunpack.c.l.b16 %v285
    %v325 = vunpack.c.l.b16 %v286
    %v326 = vunpack.c.l.b16 %v287
    %v327 = vunpack.c.l.b16 %v288
    %v328 = vunpack.c.l.b16 %v289
    %v329 = vpack.c.b16 %v314, %v313
    %v330 = vpack.c.b16 %v316, %v315
    %v331 = vpack.c.b16 %v318, %v317
    %v332 = vpack.c.b16 %v320, %v319
    %v333 = vpack.c.b16 %v322, %v321
    %v334 = vpack.c.b16 %v324, %v323
    %v335 = vpack.c.b16 %v326, %v325
    %v336 = vpack.c.b16 %v328, %v327
    %345 = vmatprep.subr.bf16.mxu0 0
    %346 = vmatpush1.bf16.msra.mxu0 %v336
    %347 = vmatprep.subr.bf16.mxu0 0
    %348 = vmatpush1.bf16.msra.mxu0 %v335
    %349 = vmatprep.subr.bf16.mxu0 0
    %350 = vmatpush1.bf16.msra.mxu0 %v334
    %351 = vmatprep.subr.bf16.mxu0 0
    %352 = vmatpush1.bf16.msra.mxu0 %v333
    %353 = vmatprep.subr.bf16.mxu0 0
    %354 = vmatpush1.bf16.msra.mxu0 %v332
    %355 = vmatprep.subr.bf16.mxu0 0
    %356 = vmatpush1.bf16.msra.mxu0 %v331
    %357 = vmatprep.subr.bf16.mxu0 0
    %358 = vmatpush1.bf16.msra.mxu0 %v330
    %359 = vmatprep.subr.bf16.mxu0 0
    %360 = vmatpush1.bf16.msra.mxu0 %v329
    %361 = vmatprep.subr.bf16.mxu0 0
    %362 = vmatpush2.bf16.msra.mxu0 0
    %363 = vmatprep.subr.bf16.mxu0 0
    %364 = vmatpush2.bf16.msra.mxu0 0
    %365 = vmatprep.subr.bf16.mxu0 0
    %366 = vmatpush2.bf16.msra.mxu0 0
    %367 = vmatprep.subr.bf16.mxu0 0
    %368 = vmatpush2.bf16.msra.mxu0 0
    %369 = vmatprep.subr.bf16.mxu0 0
    %370 = vmatpush2.bf16.msra.mxu0 0
    %371 = vmatprep.subr.bf16.mxu0 0
    %372 = vmatpush2.bf16.msra.mxu0 0
    %373 = vmatprep.subr.bf16.mxu0 0
    %374 = vmatpush2.bf16.msra.mxu0 0
    %375 = vmatprep.subr.bf16.mxu0 0
    %376 = vmatpush2.bf16.msra.mxu0 0
    %377 = vmatprep.mubr.bf16.mxu0 0
    %378 = vmatmul.mubr.bf16.gmra.mxu0 %v273
    %v379 = vpop.f32.mrf.mxu0
    %v380 = vadd.f32 %v295, %v379
    %v381 = vpop.f32.mrf.mxu0
    %v382 = vpop.f32.mrf.mxu0
    %v383 = vadd.f32 %v295, %v382
    %v384 = vpop.f32.mrf.mxu0
    %385 = vdwg.mxu0
    %vm386 = vcmask 64512
    %387 = vst.msk [vmem:[%s7] sm:$0xff] %vm386, %v380
    %388 = vst.msk [vmem:[%s7 + $0x8] sm:$0xff] %vm386, %v383
    // Predicated region
    $region34: #{mlp_forward.1} parent=1 // pred_check
      _
    $region35: #{mlp_forward.1} parent=1 // pred_check_branch
      %390 = sbr.rel (0) target = $region37
    $region36: #{mlp_forward.1} parent=1 // pred_region
      _
    $region37: #{mlp_forward.1} parent=1 // pred_fallthru
      _
    // Predicated region
    $region38: #{mlp_forward.1} parent=1 // pred_check
      _
    $region39: #{mlp_forward.1} parent=1 // pred_check_branch
      %392 = sbr.rel (0) target = $region41
    $region40: #{mlp_forward.1} parent=1 // pred_region
      _
    $region41: #{mlp_forward.1} parent=1 // pred_fallthru
      _
    %393 = vsyncpa [#allocation3], 1

</llo_original>
